<compile_context>
chip_gen: v5e
topology: v5e:2x2
jax: 0.10.0
libtpu: 0.0.40
codegen_flags: <defaults>
</compile_context>

<pallas_src>
import functools

import jax
import jax.numpy as jnp
from jax.experimental import pallas as pl
from jax.experimental.pallas import tpu as pltpu

IGNORE_ID = -100
MAX_ENTITY_LENGTH = 30
MAX_LANE_TILE = 4096      # ~3 MiB double-buffered block set at f32 -> fits v5e/v6e/v7x VMEM
N_CORE_SPLITS = 2         # v7x has 2 TensorCores; harmless serial axis on v5e/v6e


def _two_class_hinge(s0, s1, beta):
    """2-class softmax prob p0 = sigmoid(s0 - s1); hinge values for target=0 and target=1."""
    p0 = 1.0 / (1.0 + jnp.exp(s1 - s0))          # EUP exp + divide
    p1 = 1.0 - p0
    h0 = jnp.maximum(beta - p0, 0.0) + jnp.maximum(p1 - beta, 0.0)
    h1 = jnp.maximum(p0 - beta, 0.0) + jnp.maximum(beta - p1, 0.0)
    return h0, h1


def _custom_loss_kernel(span_ref, start_ref, end_ref, labels_ref, out_ref, acc_ref, *,
                        beta, span_coef, start_coef, end_coef,
                        bt_total, lane_tile, inner_tiles):
    c = pl.program_id(0)          # core-split axis ("parallel")
    i = pl.program_id(1)          # tile/reduction axis ("arbitrary")

    @pl.when(i == 0)
    def _init():
        acc_ref[...] = jnp.zeros_like(acc_ref)

    L, tile = labels_ref.shape

    # Mask lanes past the real token count (ragged last tile / duplicated padding tiles of the
    # core split). Content of those lanes is unspecified, so every use below goes through a
    # select rather than a multiply (keeps NaN garbage out of the sums).
    tile_idx = c * inner_tiles + i
    lane_ids = jax.lax.broadcasted_iota(jnp.int32, (1, tile), 1)
    in_range = (tile_idx * lane_tile + lane_ids) < bt_total              # (1, tile)

    labels = labels_ref[...]                                             # (L, tile) int32
    is0 = jnp.logical_and(labels == 0, in_range)                         # (L, tile)
    is1 = jnp.logical_and(labels == 1, in_range)

    # Per-token valid-label counts over L (also the global denominator).
    n0 = jnp.sum(is0.astype(jnp.float32), axis=0, keepdims=True)         # (1, tile)
    n1 = jnp.sum(is1.astype(jnp.float32), axis=0, keepdims=True)
    cnt = n0 + n1

    # --- span branch: per (l, token) hinge, selected by label ---
    h0, h1 = _two_class_hinge(span_ref[0].astype(jnp.float32),
                              span_ref[1].astype(jnp.float32), beta)     # (L, tile)
    span_elem = jnp.where(is0, h0, jnp.where(is1, h1, 0.0))
    span_tok = jnp.sum(span_elem, axis=0, keepdims=True)                 # (1, tile)

    # --- start / end branches: hinge independent of L -> weight by label counts ---
    st = start_ref[...].astype(jnp.float32)                              # (2, tile)
    sh0, sh1 = _two_class_hinge(st[0:1], st[1:2], beta)                  # (1, tile)
    start_tok = jnp.where(cnt > 0.0, sh0 * n0 + sh1 * n1, 0.0)

    en = end_ref[...].astype(jnp.float32)
    eh0, eh1 = _two_class_hinge(en[0:1], en[1:2], beta)
    end_tok = jnp.where(cnt > 0.0, eh0 * n0 + eh1 * n1, 0.0)

    # Per-lane accumulation (weights folded in); cross-lane reduction deferred to the host.
    acc_ref[0:1, :] += span_coef * span_tok + start_coef * start_tok + end_coef * end_tok
    acc_ref[1:2, :] += cnt

    @pl.when(i == pl.num_programs(1) - 1)
    def _finalize():
        out_ref[0] = acc_ref[...]


def custom_loss(output, labels, *, n_classes=2, beta=0.6,
                span_coef=0.6, start_coef=0.2, end_coef=0.2,
                max_lane_tile=MAX_LANE_TILE, n_core_splits=N_CORE_SPLITS):
    """output = (span_logits (B,T,L,C), start_logits (B,T,C), end_logits (B,T,C));
    labels (B,T,L) int with values in {0, 1, -100}."""
    span, start, end = output
    B, T, L, C = span.shape
    assert C == 2 and n_classes == 2, "kernel specialized for the module default n_classes=2"
    # TODO(synk): general n_classes path (softmax over a class axis) not implemented here.
    BT = B * T

    # Relayout only: one XLA transpose per tensor, NO padding, NO dtype upcast
    # (the kernel upcasts to f32 internally, so bf16 logits move half the HBM bytes).
    span_k = jnp.transpose(span.reshape(BT, L, C), (2, 1, 0))                  # (C, L, BT)
    start_k = jnp.transpose(start.reshape(BT, C), (1, 0))                      # (C, BT)
    end_k = jnp.transpose(end.reshape(BT, C), (1, 0))                          # (C, BT)
    labels_k = jnp.transpose(labels.reshape(BT, L), (1, 0)).astype(jnp.int32)  # (L, BT)

    # Tile the token axis onto lanes: full-width single block for small inputs (block == full
    # array dim, so no (8,128) constraint), otherwise big 128-aligned tiles with the ragged
    # last tile handled by the in-kernel lane mask.
    lane_tile = BT if BT <= max_lane_tile else max_lane_tile
    num_tiles = pl.cdiv(BT, lane_tile)
    ncores = n_core_splits
    inner = pl.cdiv(num_tiles, ncores)

    def lane_block(c, i):
        # Padding iterations of the core split re-read the last real tile (masked in-kernel),
        # so the DMA never goes out of bounds.
        return jnp.minimum(c * inner + i, num_tiles - 1)

    kernel = functools.partial(
        _custom_loss_kernel, beta=beta, span_coef=span_coef,
        start_coef=start_coef, end_coef=end_coef,
        bt_total=BT, lane_tile=lane_tile, inner_tiles=inner)

    partials = pl.pallas_call(
        kernel,
        out_shape=jax.ShapeDtypeStruct((ncores, 2, lane_tile), jnp.float32),
        grid_spec=pltpu.PrefetchScalarGridSpec(
            num_scalar_prefetch=0,
            grid=(ncores, inner),
            in_specs=[
                pl.BlockSpec((C, L, lane_tile), lambda c, i: (0, 0, lane_block(c, i))),
                pl.BlockSpec((C, lane_tile), lambda c, i: (0, lane_block(c, i))),
                pl.BlockSpec((C, lane_tile), lambda c, i: (0, lane_block(c, i))),
                pl.BlockSpec((L, lane_tile), lambda c, i: (0, lane_block(c, i))),
            ],
            out_specs=pl.BlockSpec((1, 2, lane_tile), lambda c, i: (c, 0, 0)),
            scratch_shapes=[pltpu.VMEM((2, lane_tile), jnp.float32)],
        ),
        compiler_params=pltpu.CompilerParams(
            dimension_semantics=("parallel", "arbitrary")),
    )(span_k, start_k, end_k, labels_k)

    total = jnp.sum(partials[:, 0, :])
    count = jnp.sum(partials[:, 1, :])
    # NOTE: if every label is IGNORE_ID this divides by zero (NaN) — same as a mean over an
    # empty set in the reference loss.
    return total / count


# ----------------------- pure-JAX reference (for validation) -----------------------
def _ctl_ref(logits, labels, n_classes, beta):
    p = jax.nn.softmax(logits.astype(jnp.float32), axis=-1)
    onehot = labels[..., None] == jnp.arange(n_classes, dtype=jnp.int32)
    hinge = jnp.where(onehot, jnp.maximum(beta - p, 0.0), jnp.maximum(p - beta, 0.0))
    elem = jnp.sum(hinge, axis=-1)
    valid = (labels != IGNORE_ID).astype(jnp.float32)
    return jnp.sum(elem * valid) / jnp.sum(valid)


def custom_loss_reference(output, labels, *, n_classes=2, beta=0.6):
    span, start, end = output
    start_rep = jnp.broadcast_to(start[:, :, None, :], span.shape)
    end_rep = jnp.broadcast_to(end[:, :, None, :], span.shape)
    return (0.6 * _ctl_ref(span, labels, n_classes, beta)
            + 0.2 * _ctl_ref(start_rep, labels, n_classes, beta)
            + 0.2 * _ctl_ref(end_rep, labels, n_classes, beta))


if __name__ == "__main__":
    def run_case(B, T, seed):
        L, C = MAX_ENTITY_LENGTH, 2
        key = jax.random.PRNGKey(seed)
        k1, k2, k3, k4, k5 = jax.random.split(key, 5)
        span_logits = jax.random.normal(k1, (B, T, L, C), dtype=jnp.float32)
        start_logits = jax.random.normal(k2, (B, T, C), dtype=jnp.float32)
        end_logits = jax.random.normal(k3, (B, T, C), dtype=jnp.float32)
        labels = jax.random.randint(k4, (B, T, L), 0, C, dtype=jnp.int32)
        ignore_mask = jax.random.bernoulli(k5, 0.3, (B, T, L))
        labels = jnp.where(ignore_mask, IGNORE_ID, labels)

        out = custom_loss((span_logits, start_logits, end_logits), labels,
                          n_classes=C, beta=0.6)
        out = jax.block_until_ready(out)
        ref = custom_loss_reference((span_logits, start_logits, end_logits), labels,
                                    n_classes=C, beta=0.6)
        assert jnp.allclose(out, ref, atol=1e-5, rtol=1e-4), (B, T, out, ref)

    run_case(2, 8, 0)       # small shape: single full-width block, no partial tiles
    run_case(2, 2500, 1)    # BT=5000 > 4096: multi-tile, ragged last tile + core split path
    print("KERNEL_OK")
</pallas_src>

<mosaic_0001>
module attributes {stable_mosaic.version = 11 : i64} {
  func.func @_custom_loss_kernel(%arg0: i32, %arg1: i32, %arg2: memref<2x30x16xf32, #tpu.memory_space<vmem>>, %arg3: memref<2x16xf32, #tpu.memory_space<vmem>>, %arg4: memref<2x16xf32, #tpu.memory_space<vmem>>, %arg5: memref<30x16xi32, #tpu.memory_space<vmem>>, %arg6: memref<1x2x16xf32, #tpu.memory_space<vmem>>, %arg7: memref<2x16xf32, #tpu.memory_space<vmem>>) attributes {dimension_semantics = [#tpu.dimension_semantics<parallel>, #tpu.dimension_semantics<arbitrary>], iteration_bounds = array<i64: 2, 1>, scalar_prefetch = 0 : i64, scratch_operands = 1 : i64, tpu.core_type = #tpu.core_type<tc>, window_params = [{transform_indices = @transform_0, window_bounds = array<i64: 2, 30, 16>}, {transform_indices = @transform_1, window_bounds = array<i64: 2, 16>}, {transform_indices = @transform_2, window_bounds = array<i64: 2, 16>}, {transform_indices = @transform_3, window_bounds = array<i64: 30, 16>}, {transform_indices = @transform_4, window_bounds = array<i64: 1, 2, 16>}]} {
    %c0_i32 = arith.constant 0 : i32
    %0 = arith.cmpi eq, %arg1, %c0_i32 : i32
    %1 = arith.extui %0 : i1 to i32
    %c0_i32_0 = arith.constant 0 : i32
    %2 = arith.cmpi ne, %1, %c0_i32_0 : i32
    scf.if %2 {
      %cst_67 = arith.constant 0.000000e+00 : f32
      %153 = vector.broadcast %cst_67 : f32 to vector<2x16xf32>
      %c0_68 = arith.constant 0 : index
      %c0_69 = arith.constant 0 : index
      %154 = vector.load %arg7[%c0_68, %c0_69] : memref<2x16xf32, #tpu.memory_space<vmem>>, vector<2x16xf32>
      tpu.vector_store %arg7[%c0_68, %c0_69], %153 {strides = array<i32>} : memref<2x16xf32, #tpu.memory_space<vmem>>, vector<2x16xf32>,
    } else {
    }
    %c1_i32 = arith.constant 1 : i32
    %3 = arith.muli %arg0, %c1_i32 : i32
    %4 = arith.addi %3, %arg1 : i32
    %5 = tpu.iota {dimensions = array<i32: 1>} : vector<1x16xi32>
    %c16_i32 = arith.constant 16 : i32
    %6 = arith.muli %4, %c16_i32 : i32
    %7 = vector.broadcast %6 : i32 to vector<1x16xi32>
    %8 = arith.addi %7, %5 : vector<1x16xi32>
    %c16_i32_1 = arith.constant 16 : i32
    %9 = vector.broadcast %c16_i32_1 : i32 to vector<1x16xi32>
    %10 = arith.cmpi slt, %8, %9 : vector<1x16xi32>
    %c0 = arith.constant 0 : index
    %c0_2 = arith.constant 0 : index
    %11 = vector.load %arg5[%c0, %c0_2] : memref<30x16xi32, #tpu.memory_space<vmem>>, vector<30x16xi32>
    %c0_i32_3 = arith.constant 0 : i32
    %12 = vector.broadcast %c0_i32_3 : i32 to vector<30x16xi32>
    %13 = arith.cmpi eq, %11, %12 : vector<30x16xi32>
    %14 = vector.broadcast %10 : vector<1x16xi1> to vector<30x16xi1>
    %15 = arith.andi %13, %14 : vector<30x16xi1>
    %c1_i32_4 = arith.constant 1 : i32
    %16 = vector.broadcast %c1_i32_4 : i32 to vector<30x16xi32>
    %17 = arith.cmpi eq, %11, %16 : vector<30x16xi32>
    %18 = vector.broadcast %10 : vector<1x16xi1> to vector<30x16xi1>
    %19 = arith.andi %17, %18 : vector<30x16xi1>
    %20 = arith.extui %15 : vector<30x16xi1> to vector<30x16xi32>
    %21 = arith.sitofp %20 : vector<30x16xi32> to vector<30x16xf32>
    %cst = arith.constant dense<0.000000e+00> : vector<16xf32>
    %22 = vector.multi_reduction <add>, %21, %cst [0] : vector<30x16xf32> to vector<16xf32>
    %23 = vector.shape_cast %22 : vector<16xf32> to vector<1x16xf32>
    %24 = arith.extui %19 : vector<30x16xi1> to vector<30x16xi32>
    %25 = arith.sitofp %24 : vector<30x16xi32> to vector<30x16xf32>
    %cst_5 = arith.constant dense<0.000000e+00> : vector<16xf32>
    %26 = vector.multi_reduction <add>, %25, %cst_5 [0] : vector<30x16xf32> to vector<16xf32>
    %27 = vector.shape_cast %26 : vector<16xf32> to vector<1x16xf32>
    %28 = arith.addf %23, %27 : vector<1x16xf32>
    %c0_6 = arith.constant 0 : index
    %c0_7 = arith.constant 0 : index
    %c0_8 = arith.constant 0 : index
    %29 = vector.load %arg2[%c0_6, %c0_7, %c0_8] : memref<2x30x16xf32, #tpu.memory_space<vmem>>, vector<1x30x16xf32>
    %30 = vector.shape_cast %29 : vector<1x30x16xf32> to vector<30x16xf32>
    %c1 = arith.constant 1 : index
    %c0_9 = arith.constant 0 : index
    %c0_10 = arith.constant 0 : index
    %31 = vector.load %arg2[%c1, %c0_9, %c0_10] : memref<2x30x16xf32, #tpu.memory_space<vmem>>, vector<1x30x16xf32>
    %32 = vector.shape_cast %31 : vector<1x30x16xf32> to vector<30x16xf32>
    %33 = arith.subf %32, %30 : vector<30x16xf32>
    %34 = math.exp %33 : vector<30x16xf32>
    %cst_11 = arith.constant 1.000000e+00 : f32
    %35 = vector.broadcast %cst_11 : f32 to vector<30x16xf32>
    %36 = arith.addf %35, %34 : vector<30x16xf32>
    %cst_12 = arith.constant 1.000000e+00 : f32
    %37 = vector.broadcast %cst_12 : f32 to vector<30x16xf32>
    %38 = arith.divf %37, %36 : vector<30x16xf32>
    %cst_13 = arith.constant 1.000000e+00 : f32
    %39 = vector.broadcast %cst_13 : f32 to vector<30x16xf32>
    %40 = arith.subf %39, %38 : vector<30x16xf32>
    %cst_14 = arith.constant 6.000000e-01 : f32
    %41 = vector.broadcast %cst_14 : f32 to vector<30x16xf32>
    %42 = arith.subf %41, %38 : vector<30x16xf32>
    %cst_15 = arith.constant 0.000000e+00 : f32
    %43 = vector.broadcast %cst_15 : f32 to vector<30x16xf32>
    %44 = arith.maximumf %42, %43 : vector<30x16xf32>
    %cst_16 = arith.constant 6.000000e-01 : f32
    %45 = vector.broadcast %cst_16 : f32 to vector<30x16xf32>
    %46 = arith.subf %40, %45 : vector<30x16xf32>
    %cst_17 = arith.constant 0.000000e+00 : f32
    %47 = vector.broadcast %cst_17 : f32 to vector<30x16xf32>
    %48 = arith.maximumf %46, %47 : vector<30x16xf32>
    %49 = arith.addf %44, %48 : vector<30x16xf32>
    %cst_18 = arith.constant 6.000000e-01 : f32
    %50 = vector.broadcast %cst_18 : f32 to vector<30x16xf32>
    %51 = arith.subf %38, %50 : vector<30x16xf32>
    %cst_19 = arith.constant 0.000000e+00 : f32
    %52 = vector.broadcast %cst_19 : f32 to vector<30x16xf32>
    %53 = arith.maximumf %51, %52 : vector<30x16xf32>
    %cst_20 = arith.constant 6.000000e-01 : f32
    %54 = vector.broadcast %cst_20 : f32 to vector<30x16xf32>
    %55 = arith.subf %54, %40 : vector<30x16xf32>
    %cst_21 = arith.constant 0.000000e+00 : f32
    %56 = vector.broadcast %cst_21 : f32 to vector<30x16xf32>
    %57 = arith.maximumf %55, %56 : vector<30x16xf32>
    %58 = arith.addf %53, %57 : vector<30x16xf32>
    %cst_22 = arith.constant 0.000000e+00 : f32
    %59 = vector.broadcast %cst_22 : f32 to vector<30x16xf32>
    %60 = arith.select %19, %58, %59 : vector<30x16xi1>, vector<30x16xf32>
    %61 = arith.select %15, %49, %60 : vector<30x16xi1>, vector<30x16xf32>
    %cst_23 = arith.constant dense<0.000000e+00> : vector<16xf32>
    %62 = vector.multi_reduction <add>, %61, %cst_23 [0] : vector<30x16xf32> to vector<16xf32>
    %63 = vector.shape_cast %62 : vector<16xf32> to vector<1x16xf32>
    %c0_24 = arith.constant 0 : index
    %c0_25 = arith.constant 0 : index
    %64 = vector.load %arg3[%c0_24, %c0_25] : memref<2x16xf32, #tpu.memory_space<vmem>>, vector<2x16xf32>
    %65 = vector.extract_strided_slice %64 {offsets = [0, 0], sizes = [1, 16], strides = [1, 1]} : vector<2x16xf32> to vector<1x16xf32>
    %66 = vector.extract_strided_slice %64 {offsets = [1, 0], sizes = [1, 16], strides = [1, 1]} : vector<2x16xf32> to vector<1x16xf32>
    %67 = arith.subf %66, %65 : vector<1x16xf32>
    %68 = math.exp %67 : vector<1x16xf32>
    %cst_26 = arith.constant 1.000000e+00 : f32
    %69 = vector.broadcast %cst_26 : f32 to vector<1x16xf32>
    %70 = arith.addf %69, %68 : vector<1x16xf32>
    %cst_27 = arith.constant 1.000000e+00 : f32
    %71 = vector.broadcast %cst_27 : f32 to vector<1x16xf32>
    %72 = arith.divf %71, %70 : vector<1x16xf32>
    %cst_28 = arith.constant 1.000000e+00 : f32
    %73 = vector.broadcast %cst_28 : f32 to vector<1x16xf32>
    %74 = arith.subf %73, %72 : vector<1x16xf32>
    %cst_29 = arith.constant 6.000000e-01 : f32
    %75 = vector.broadcast %cst_29 : f32 to vector<1x16xf32>
    %76 = arith.subf %75, %72 : vector<1x16xf32>
    %cst_30 = arith.constant 0.000000e+00 : f32
    %77 = vector.broadcast %cst_30 : f32 to vector<1x16xf32>
    %78 = arith.maximumf %76, %77 : vector<1x16xf32>
    %cst_31 = arith.constant 6.000000e-01 : f32
    %79 = vector.broadcast %cst_31 : f32 to vector<1x16xf32>
    %80 = arith.subf %74, %79 : vector<1x16xf32>
    %cst_32 = arith.constant 0.000000e+00 : f32
    %81 = vector.broadcast %cst_32 : f32 to vector<1x16xf32>
    %82 = arith.maximumf %80, %81 : vector<1x16xf32>
    %83 = arith.addf %78, %82 : vector<1x16xf32>
    %cst_33 = arith.constant 6.000000e-01 : f32
    %84 = vector.broadcast %cst_33 : f32 to vector<1x16xf32>
    %85 = arith.subf %72, %84 : vector<1x16xf32>
    %cst_34 = arith.constant 0.000000e+00 : f32
    %86 = vector.broadcast %cst_34 : f32 to vector<1x16xf32>
    %87 = arith.maximumf %85, %86 : vector<1x16xf32>
    %cst_35 = arith.constant 6.000000e-01 : f32
    %88 = vector.broadcast %cst_35 : f32 to vector<1x16xf32>
    %89 = arith.subf %88, %74 : vector<1x16xf32>
    %cst_36 = arith.constant 0.000000e+00 : f32
    %90 = vector.broadcast %cst_36 : f32 to vector<1x16xf32>
    %91 = arith.maximumf %89, %90 : vector<1x16xf32>
    %92 = arith.addf %87, %91 : vector<1x16xf32>
    %cst_37 = arith.constant 0.000000e+00 : f32
    %93 = vector.broadcast %cst_37 : f32 to vector<1x16xf32>
    %94 = arith.cmpf ogt, %28, %93 : vector<1x16xf32>
    %95 = arith.mulf %83, %23 : vector<1x16xf32>
    %96 = arith.mulf %92, %27 : vector<1x16xf32>
    %97 = arith.addf %95, %96 : vector<1x16xf32>
    %cst_38 = arith.constant 0.000000e+00 : f32
    %98 = vector.broadcast %cst_38 : f32 to vector<1x16xf32>
    %99 = arith.select %94, %97, %98 : vector<1x16xi1>, vector<1x16xf32>
    %c0_39 = arith.constant 0 : index
    %c0_40 = arith.constant 0 : index
    %100 = vector.load %arg4[%c0_39, %c0_40] : memref<2x16xf32, #tpu.memory_space<vmem>>, vector<2x16xf32>
    %101 = vector.extract_strided_slice %100 {offsets = [0, 0], sizes = [1, 16], strides = [1, 1]} : vector<2x16xf32> to vector<1x16xf32>
    %102 = vector.extract_strided_slice %100 {offsets = [1, 0], sizes = [1, 16], strides = [1, 1]} : vector<2x16xf32> to vector<1x16xf32>
    %103 = arith.subf %102, %101 : vector<1x16xf32>
    %104 = math.exp %103 : vector<1x16xf32>
    %cst_41 = arith.constant 1.000000e+00 : f32
    %105 = vector.broadcast %cst_41 : f32 to vector<1x16xf32>
    %106 = arith.addf %105, %104 : vector<1x16xf32>
    %cst_42 = arith.constant 1.000000e+00 : f32
    %107 = vector.broadcast %cst_42 : f32 to vector<1x16xf32>
    %108 = arith.divf %107, %106 : vector<1x16xf32>
    %cst_43 = arith.constant 1.000000e+00 : f32
    %109 = vector.broadcast %cst_43 : f32 to vector<1x16xf32>
    %110 = arith.subf %109, %108 : vector<1x16xf32>
    %cst_44 = arith.constant 6.000000e-01 : f32
    %111 = vector.broadcast %cst_44 : f32 to vector<1x16xf32>
    %112 = arith.subf %111, %108 : vector<1x16xf32>
    %cst_45 = arith.constant 0.000000e+00 : f32
    %113 = vector.broadcast %cst_45 : f32 to vector<1x16xf32>
    %114 = arith.maximumf %112, %113 : vector<1x16xf32>
    %cst_46 = arith.constant 6.000000e-01 : f32
    %115 = vector.broadcast %cst_46 : f32 to vector<1x16xf32>
    %116 = arith.subf %110, %115 : vector<1x16xf32>
    %cst_47 = arith.constant 0.000000e+00 : f32
    %117 = vector.broadcast %cst_47 : f32 to vector<1x16xf32>
    %118 = arith.maximumf %116, %117 : vector<1x16xf32>
    %119 = arith.addf %114, %118 : vector<1x16xf32>
    %cst_48 = arith.constant 6.000000e-01 : f32
    %120 = vector.broadcast %cst_48 : f32 to vector<1x16xf32>
    %121 = arith.subf %108, %120 : vector<1x16xf32>
    %cst_49 = arith.constant 0.000000e+00 : f32
    %122 = vector.broadcast %cst_49 : f32 to vector<1x16xf32>
    %123 = arith.maximumf %121, %122 : vector<1x16xf32>
    %cst_50 = arith.constant 6.000000e-01 : f32
    %124 = vector.broadcast %cst_50 : f32 to vector<1x16xf32>
    %125 = arith.subf %124, %110 : vector<1x16xf32>
    %cst_51 = arith.constant 0.000000e+00 : f32
    %126 = vector.broadcast %cst_51 : f32 to vector<1x16xf32>
    %127 = arith.maximumf %125, %126 : vector<1x16xf32>
    %128 = arith.addf %123, %127 : vector<1x16xf32>
    %cst_52 = arith.constant 0.000000e+00 : f32
    %129 = vector.broadcast %cst_52 : f32 to vector<1x16xf32>
    %130 = arith.cmpf ogt, %28, %129 : vector<1x16xf32>
    %131 = arith.mulf %119, %23 : vector<1x16xf32>
    %132 = arith.mulf %128, %27 : vector<1x16xf32>
    %133 = arith.addf %131, %132 : vector<1x16xf32>
    %cst_53 = arith.constant 0.000000e+00 : f32
    %134 = vector.broadcast %cst_53 : f32 to vector<1x16xf32>
    %135 = arith.select %130, %133, %134 : vector<1x16xi1>, vector<1x16xf32>
    %c0_54 = arith.constant 0 : index
    %c0_55 = arith.constant 0 : index
    %136 = vector.load %arg7[%c0_54, %c0_55] : memref<2x16xf32, #tpu.memory_space<vmem>>, vector<1x16xf32>
    %cst_56 = arith.constant 6.000000e-01 : f32
    %137 = vector.broadcast %cst_56 : f32 to vector<1x16xf32>
    %138 = arith.mulf %137, %63 : vector<1x16xf32>
    %cst_57 = arith.constant 2.000000e-01 : f32
    %139 = vector.broadcast %cst_57 : f32 to vector<1x16xf32>
    %140 = arith.mulf %139, %99 : vector<1x16xf32>
    %141 = arith.addf %138, %140 : vector<1x16xf32>
    %cst_58 = arith.constant 2.000000e-01 : f32
    %142 = vector.broadcast %cst_58 : f32 to vector<1x16xf32>
    %143 = arith.mulf %142, %135 : vector<1x16xf32>
    %144 = arith.addf %141, %143 : vector<1x16xf32>
    %145 = arith.addf %136, %144 : vector<1x16xf32>
    %c0_59 = arith.constant 0 : index
    %c0_60 = arith.constant 0 : index
    %146 = vector.load %arg7[%c0_59, %c0_60] : memref<2x16xf32, #tpu.memory_space<vmem>>, vector<1x16xf32>
    tpu.vector_store %arg7[%c0_59, %c0_60], %145 {strides = array<i32>} : memref<2x16xf32, #tpu.memory_space<vmem>>, vector<1x16xf32>,
    %c1_61 = arith.constant 1 : index
    %c0_62 = arith.constant 0 : index
    %147 = vector.load %arg7[%c1_61, %c0_62] : memref<2x16xf32, #tpu.memory_space<vmem>>, vector<1x16xf32>
    %148 = arith.addf %147, %28 : vector<1x16xf32>
    %c1_63 = arith.constant 1 : index
    %c0_64 = arith.constant 0 : index
    %149 = vector.load %arg7[%c1_63, %c0_64] : memref<2x16xf32, #tpu.memory_space<vmem>>, vector<1x16xf32>
    tpu.vector_store %arg7[%c1_63, %c0_64], %148 {strides = array<i32>} : memref<2x16xf32, #tpu.memory_space<vmem>>, vector<1x16xf32>,
    %c0_i32_65 = arith.constant 0 : i32
    %150 = arith.cmpi eq, %arg1, %c0_i32_65 : i32
    %151 = arith.extui %150 : i1 to i32
    %c0_i32_66 = arith.constant 0 : i32
    %152 = arith.cmpi ne, %151, %c0_i32_66 : i32
    scf.if %152 {
      %c0_67 = arith.constant 0 : index
      %c0_68 = arith.constant 0 : index
      %153 = vector.load %arg7[%c0_67, %c0_68] : memref<2x16xf32, #tpu.memory_space<vmem>>, vector<2x16xf32>
      %c0_69 = arith.constant 0 : index
      %c0_70 = arith.constant 0 : index
      %c0_71 = arith.constant 0 : index
      %154 = vector.load %arg6[%c0_69, %c0_70, %c0_71] : memref<1x2x16xf32, #tpu.memory_space<vmem>>, vector<1x2x16xf32>
      %155 = vector.shape_cast %154 : vector<1x2x16xf32> to vector<2x16xf32>
      %156 = vector.shape_cast %153 : vector<2x16xf32> to vector<1x2x16xf32>
      tpu.vector_store %arg6[%c0_69, %c0_70, %c0_71], %156 {strides = array<i32>} : memref<1x2x16xf32, #tpu.memory_space<vmem>>, vector<1x2x16xf32>,
    } else {
    }
    return
  }
  func.func @transform_0(%arg0: i32, %arg1: i32) -> (i32, i32, i32) {
    %c1_i32 = arith.constant 1 : i32
    %0 = arith.muli %arg0, %c1_i32 : i32
    %1 = arith.addi %0, %arg1 : i32
    %c0_i32 = arith.constant 0 : i32
    %2 = arith.minsi %1, %c0_i32 : i32
    %c0_i32_0 = arith.constant 0 : i32
    %c0_i32_1 = arith.constant 0 : i32
    %c0_i32_2 = arith.constant 0 : i32
    return %c0_i32_0, %c0_i32_1, %2 : i32, i32, i32
  }
  func.func @transform_1(%arg0: i32, %arg1: i32) -> (i32, i32) {
    %c1_i32 = arith.constant 1 : i32
    %0 = arith.muli %arg0, %c1_i32 : i32
    %1 = arith.addi %0, %arg1 : i32
    %c0_i32 = arith.constant 0 : i32
    %2 = arith.minsi %1, %c0_i32 : i32
    %c0_i32_0 = arith.constant 0 : i32
    %c0_i32_1 = arith.constant 0 : i32
    return %c0_i32_0, %2 : i32, i32
  }
  func.func @transform_2(%arg0: i32, %arg1: i32) -> (i32, i32) {
    %c1_i32 = arith.constant 1 : i32
    %0 = arith.muli %arg0, %c1_i32 : i32
    %1 = arith.addi %0, %arg1 : i32
    %c0_i32 = arith.constant 0 : i32
    %2 = arith.minsi %1, %c0_i32 : i32
    %c0_i32_0 = arith.constant 0 : i32
    %c0_i32_1 = arith.constant 0 : i32
    return %c0_i32_0, %2 : i32, i32
  }
  func.func @transform_3(%arg0: i32, %arg1: i32) -> (i32, i32) {
    %c1_i32 = arith.constant 1 : i32
    %0 = arith.muli %arg0, %c1_i32 : i32
    %1 = arith.addi %0, %arg1 : i32
    %c0_i32 = arith.constant 0 : i32
    %2 = arith.minsi %1, %c0_i32 : i32
    %c0_i32_0 = arith.constant 0 : i32
    %c0_i32_1 = arith.constant 0 : i32
    return %c0_i32_0, %2 : i32, i32
  }
  func.func @transform_4(%arg0: i32, %arg1: i32) -> (i32, i32, i32) {
    %c0_i32 = arith.constant 0 : i32
    %c0_i32_0 = arith.constant 0 : i32
    %c0_i32_1 = arith.constant 0 : i32
    return %arg0, %c0_i32, %c0_i32_0 : i32, i32, i32
  }
}

</mosaic_0001>

<llo_original>
// kernel: tpu_custom_call.1
$region0: #{tpu_custom_call.1}
  #allocation0 [shape = 'u32[]', space=smem, size = 0x4, offset = 0x4, fixed_abs, tag = 'smem constant byte address 0x4 - core index']
  #allocation1 [shape = 'u32[72,128]{1,0:T(1,128)}', space=vmem, size = 0x9000, scoped, tag = 'internal scratch']
  #allocation2 [shape = 'f32[2,16]{1,0:T(2,128)}', space=vmem, size = 0x400, scoped, tag = 'scratch operand']
  %s0 = inlined_call_operand.vmem [shape: f32[2,30,16], index: 0, kind: input, shape index: {}]
  %s1 = inlined_call_operand.vmem [shape: f32[2,16], index: 1, kind: input, shape index: {}]
  %s2 = inlined_call_operand.vmem [shape: f32[2,16], index: 2, kind: input, shape index: {}]
  %s3 = inlined_call_operand.vmem [shape: s32[30,16], index: 3, kind: input, shape index: {}]
  %s4 = inlined_call_operand.hbm [shape: f32[2,2,16], index: 4, kind: output, shape index: {}]
  %s5 = sld [smem:[#allocation0]]
  $region57: #{tpu_custom_call.1} parent=0
    _
  %s7 = ssub.s32 1, %s5
  %s8 = scalar_select 0, %s7, %s5
  $region1: #{tpu_custom_call.1} parent=0
    #allocation3 [shape = 'u8[2048]{0}', space=vmem, size = 0x800, scoped, tag = 'output window, operand 0']
    #allocation4 [shape = 's32[2]{0}', space=sflag, size = 0x8, scoped, tag = 'scoped memory for tpu_custom_call.1']
    %9 = vsyncpa [#allocation4], 0
    %s10 = scalar_lea.sflag [#allocation4], 1
    %11 = vsyncpa %s10, 0
    loop: start=0, step=1, limit=4
    $region2: #{tpu_custom_call.1} parent=1 // loop_pre_header
      _
    $region3: #{tpu_custom_call.1} parent=1 // loop_header
      %s13 = sphi 0, %s17
      %p14 = scmp.ge.s32.totalorder %s13, 4
      %s20 = sphi 0, %s32
      %s21 = sphi 0, %s28
      %s22 = sphi 0, %s20
      %s23 = sphi 0, %s21
      %s24 = sphi 0, %s22
      %s25 = sphi 0, %s23
      %s41 = sphi 0, %s43
      %s44 = sphi 0, %s41
      %s45 = sphi 0, %s44
      %s61 = sphi 0, %s45
      %s73 = sphi 0, %s75
      %s76 = sphi 0, %s73
      %s77 = sphi 0, %s76
      %s93 = sphi 0, %s77
      %s105 = sphi 0, %s107
      %s108 = sphi 0, %s105
      %s109 = sphi 0, %s108
      %s125 = sphi 0, %s109
      %s137 = sphi 0, %s139
      %s140 = sphi 0, %s137
      %s141 = sphi 0, %s140
      %s157 = sphi 0, %s141
      %s163 = sphi 0, %s165
      %s166 = sphi 0, %s163
      %s167 = sphi 0, %s166
      %s183 = sphi 0, %s167
    $region4: #{tpu_custom_call.1} parent=1 // loop_header_branch
      %16 = sbr.rel (%p14) target = $region8
    $region5: #{tpu_custom_call.1} parent=1 // loop_body
      %s18 = ssub.s32 %s13, 1
      %s19 = ssub.s32 %s13, 2
      %s26 = sadd.s32 1, %s21
      %p27 = scmp.ge.s32.totalorder %s26, 1
      %s28 = scalar_select %p27, 0, %s26
      %s29 = sadd.s32 1, %s20
      %s30 = scalar_select %p27, %s29, %s20
      %p31 = scmp.ge.s32.totalorder %s30, 2
      %s32 = scalar_select %p31, 0, %s30
      %s33 = sadd.s32 %s20, %s21
      %p34 = scmp.lt.s32.totalorder %s33, 0
      %s35 = scalar_select %p34, %s33, 0
      %s36 = sadd.s32 %s32, %s28
      %p37 = scmp.lt.s32.totalorder %s36, 0
      %s38 = scalar_select %p37, %s36, 0
      %s39 = ssub.s32 %s35, %s38
      %p40 = scmp.eq.s32.totalorder %s39, 0
      %s42 = sadd.s32 %s41, 1
      %s43 = scalar_select %p40, %s41, %s42
      %p46 = pneg %p40
      %p47 = scmp.eq.s32.totalorder %s13, 1
      %p48 = por %p46, %p47
      %p49 = scmp.ne.s32.totalorder %s41, %s44
      %p50 = scmp.eq.s32.totalorder %s13, 0
      %p51 = por %p49, %p50
      %p52 = scmp.ne.s32.totalorder %s41, %s44
      %p53 = scmp.eq.s32.totalorder %s18, 1
      %p54 = por %p52, %p53
      %p55 = scmp.ne.s32.totalorder %s44, %s45
      %p56 = scmp.eq.s32.totalorder %s18, 0
      %p57 = por %p55, %p56
      %p58 = scmp.ne.s32.totalorder %s44, %s45
      %p59 = scmp.eq.s32.totalorder %s19, 1
      %p60 = por %p58, %p59
      %p62 = scmp.ne.s32.totalorder %s45, %s61
      %p63 = scmp.eq.s32.totalorder %s19, 0
      %p64 = por %p62, %p63
      %s65 = sadd.s32 %s20, %s21
      %p66 = scmp.lt.s32.totalorder %s65, 0
      %s67 = scalar_select %p66, %s65, 0
      %s68 = sadd.s32 %s32, %s28
      %p69 = scmp.lt.s32.totalorder %s68, 0
      %s70 = scalar_select %p69, %s68, 0
      %s71 = ssub.s32 %s67, %s70
      %p72 = scmp.eq.s32.totalorder %s71, 0
      %s74 = sadd.s32 %s73, 1
      %s75 = scalar_select %p72, %s73, %s74
      %p78 = pneg %p72
      %p79 = scmp.eq.s32.totalorder %s13, 1
      %p80 = por %p78, %p79
      %p81 = scmp.ne.s32.totalorder %s73, %s76
      %p82 = scmp.eq.s32.totalorder %s13, 0
      %p83 = por %p81, %p82
      %p84 = scmp.ne.s32.totalorder %s73, %s76
      %p85 = scmp.eq.s32.totalorder %s18, 1
      %p86 = por %p84, %p85
      %p87 = scmp.ne.s32.totalorder %s76, %s77
      %p88 = scmp.eq.s32.totalorder %s18, 0
      %p89 = por %p87, %p88
      %p90 = scmp.ne.s32.totalorder %s76, %s77
      %p91 = scmp.eq.s32.totalorder %s19, 1
      %p92 = por %p90, %p91
      %p94 = scmp.ne.s32.totalorder %s77, %s93
      %p95 = scmp.eq.s32.totalorder %s19, 0
      %p96 = por %p94, %p95
      %s97 = sadd.s32 %s20, %s21
      %p98 = scmp.lt.s32.totalorder %s97, 0
      %s99 = scalar_select %p98, %s97, 0
      %s100 = sadd.s32 %s32, %s28
      %p101 = scmp.lt.s32.totalorder %s100, 0
      %s102 = scalar_select %p101, %s100, 0
      %s103 = ssub.s32 %s99, %s102
      %p104 = scmp.eq.s32.totalorder %s103, 0
      %s106 = sadd.s32 %s105, 1
      %s107 = scalar_select %p104, %s105, %s106
      %p110 = pneg %p104
      %p111 = scmp.eq.s32.totalorder %s13, 1
      %p112 = por %p110, %p111
      %p113 = scmp.ne.s32.totalorder %s105, %s108
      %p114 = scmp.eq.s32.totalorder %s13, 0
      %p115 = por %p113, %p114
      %p116 = scmp.ne.s32.totalorder %s105, %s108
      %p117 = scmp.eq.s32.totalorder %s18, 1
      %p118 = por %p116, %p117
      %p119 = scmp.ne.s32.totalorder %s108, %s109
      %p120 = scmp.eq.s32.totalorder %s18, 0
      %p121 = por %p119, %p120
      %p122 = scmp.ne.s32.totalorder %s108, %s109
      %p123 = scmp.eq.s32.totalorder %s19, 1
      %p124 = por %p122, %p123
      %p126 = scmp.ne.s32.totalorder %s109, %s125
      %p127 = scmp.eq.s32.totalorder %s19, 0
      %p128 = por %p126, %p127
      %s129 = sadd.s32 %s20, %s21
      %p130 = scmp.lt.s32.totalorder %s129, 0
      %s131 = scalar_select %p130, %s129, 0
      %s132 = sadd.s32 %s32, %s28
      %p133 = scmp.lt.s32.totalorder %s132, 0
      %s134 = scalar_select %p133, %s132, 0
      %s135 = ssub.s32 %s131, %s134
      %p136 = scmp.eq.s32.totalorder %s135, 0
      %s138 = sadd.s32 %s137, 1
      %s139 = scalar_select %p136, %s137, %s138
      %p142 = pneg %p136
      %p143 = scmp.eq.s32.totalorder %s13, 1
      %p144 = por %p142, %p143
      %p145 = scmp.ne.s32.totalorder %s137, %s140
      %p146 = scmp.eq.s32.totalorder %s13, 0
      %p147 = por %p145, %p146
      %p148 = scmp.ne.s32.totalorder %s137, %s140
      %p149 = scmp.eq.s32.totalorder %s18, 1
      %p150 = por %p148, %p149
      %p151 = scmp.ne.s32.totalorder %s140, %s141
      %p152 = scmp.eq.s32.totalorder %s18, 0
      %p153 = por %p151, %p152
      %p154 = scmp.ne.s32.totalorder %s140, %s141
      %p155 = scmp.eq.s32.totalorder %s19, 1
      %p156 = por %p154, %p155
      %p158 = scmp.ne.s32.totalorder %s141, %s157
      %p159 = scmp.eq.s32.totalorder %s19, 0
      %p160 = por %p158, %p159
      %s161 = ssub.s32 %s20, %s32
      %p162 = scmp.eq.s32.totalorder %s161, 0
      %s164 = sadd.s32 %s163, 1
      %s165 = scalar_select %p162, %s163, %s164
      %p168 = pneg %p162
      %p169 = scmp.eq.s32.totalorder %s13, 1
      %p170 = por %p168, %p169
      %p171 = scmp.ne.s32.totalorder %s163, %s166
      %p172 = scmp.eq.s32.totalorder %s13, 0
      %p173 = por %p171, %p172
      %p174 = scmp.ne.s32.totalorder %s163, %s166
      %p175 = scmp.eq.s32.totalorder %s18, 1
      %p176 = por %p174, %p175
      %p177 = scmp.ne.s32.totalorder %s166, %s167
      %p178 = scmp.eq.s32.totalorder %s18, 0
      %p179 = por %p177, %p178
      %p180 = scmp.ne.s32.totalorder %s166, %s167
      %p181 = scmp.eq.s32.totalorder %s19, 1
      %p182 = por %p180, %p181
      %p184 = scmp.ne.s32.totalorder %s167, %s183
      %p185 = scmp.eq.s32.totalorder %s19, 0
      %p186 = por %p184, %p185
      %p187 = scmp.le.s32.totalorder 1, %s13
      %p188 = scmp.lt.s32.totalorder %s13, 3
      %p189 = pnand %p187, %p188
      %p190 = pneg %p189
      // Predicated region
      $region9: #{tpu_custom_call.1} parent=5 // pred_check
        _
      $region10: #{tpu_custom_call.1} parent=5 // pred_check_branch
        %192 = sbr.rel (%p189) target = $region12
      $region11: #{tpu_custom_call.1} parent=5 // pred_region
        %s193 = ssub.s32 %s13, 1
      $region12: #{tpu_custom_call.1} parent=5 // pred_fallthru
        _
      %p194 = scmp.lt.s32.totalorder %s13, 2
      // Predicated region
      $region13: #{tpu_custom_call.1} parent=5 // pred_check
        %p195 = pneg %p194
      $region14: #{tpu_custom_call.1} parent=5 // pred_check_branch
        %197 = sbr.rel (%p195) target = $region16
      $region15: #{tpu_custom_call.1} parent=5 // pred_region
        // Predicated region
        $region17: #{tpu_custom_call.1} parent=15 // pred_check
          %p198 = pneg %p51
        $region18: #{tpu_custom_call.1} parent=15 // pred_check_branch
          %200 = sbr.rel (%p198) target = $region20
        $region19: #{tpu_custom_call.1} parent=15 // pred_region
          %s201 = sadd.s32 %s20, %s21
          %p202 = scmp.lt.s32.totalorder %s201, 0
          %s203 = scalar_select %p202, %s201, 0
          %p204 = scmp.lt.s32.totalorder %s203, 0
          %s205 = scalar_select %p204, %s203, 0
          %s206 = smul.addr %s205, 8
          %s207 = scalar_lea.vmem %s0, %s206
          %s208 = sadd.s32 %s20, %s21
          %p209 = scmp.lt.s32.totalorder %s208, 0
          %s210 = scalar_select %p209, %s208, 0
        $region20: #{tpu_custom_call.1} parent=15 // pred_fallthru
          _
        // Predicated region
        $region21: #{tpu_custom_call.1} parent=15 // pred_check
          %p211 = pneg %p83
        $region22: #{tpu_custom_call.1} parent=15 // pred_check_branch
          %213 = sbr.rel (%p211) target = $region24
        $region23: #{tpu_custom_call.1} parent=15 // pred_region
          %s214 = sadd.s32 %s20, %s21
          %p215 = scmp.lt.s32.totalorder %s214, 0
          %s216 = scalar_select %p215, %s214, 0
          %p217 = scmp.lt.s32.totalorder %s216, 0
          %s218 = scalar_select %p217, %s216, 0
          %s219 = smul.addr %s218, 2
          %s220 = scalar_lea.vmem %s1, %s219
          %s221 = sadd.s32 %s20, %s21
          %p222 = scmp.lt.s32.totalorder %s221, 0
          %s223 = scalar_select %p222, %s221, 0
        $region24: #{tpu_custom_call.1} parent=15 // pred_fallthru
          _
        // Predicated region
        $region25: #{tpu_custom_call.1} parent=15 // pred_check
          %p224 = pneg %p115
        $region26: #{tpu_custom_call.1} parent=15 // pred_check_branch
          %226 = sbr.rel (%p224) target = $region28
        $region27: #{tpu_custom_call.1} parent=15 // pred_region
          %s227 = sadd.s32 %s20, %s21
          %p228 = scmp.lt.s32.totalorder %s227, 0
          %s229 = scalar_select %p228, %s227, 0
          %p230 = scmp.lt.s32.totalorder %s229, 0
          %s231 = scalar_select %p230, %s229, 0
          %s232 = smul.addr %s231, 2
          %s233 = scalar_lea.vmem %s2, %s232
          %s234 = sadd.s32 %s20, %s21
          %p235 = scmp.lt.s32.totalorder %s234, 0
          %s236 = scalar_select %p235, %s234, 0
        $region28: #{tpu_custom_call.1} parent=15 // pred_fallthru
          _
        // Predicated region
        $region29: #{tpu_custom_call.1} parent=15 // pred_check
          %p237 = pneg %p147
        $region30: #{tpu_custom_call.1} parent=15 // pred_check_branch
          %239 = sbr.rel (%p237) target = $region32
        $region31: #{tpu_custom_call.1} parent=15 // pred_region
          %s240 = sadd.s32 %s20, %s21
          %p241 = scmp.lt.s32.totalorder %s240, 0
          %s242 = scalar_select %p241, %s240, 0
          %p243 = scmp.lt.s32.totalorder %s242, 0
          %s244 = scalar_select %p243, %s242, 0
          %s245 = smul.addr %s244, 8
          %s246 = scalar_lea.vmem %s3, %s245
          %s247 = sadd.s32 %s20, %s21
          %p248 = scmp.lt.s32.totalorder %s247, 0
          %s249 = scalar_select %p248, %s247, 0
        $region32: #{tpu_custom_call.1} parent=15 // pred_fallthru
          _
      $region16: #{tpu_custom_call.1} parent=5 // pred_fallthru
        _
      %p250 = scmp.le.s32.totalorder 1, %s13
      %p251 = scmp.lt.s32.totalorder %s13, 3
      %p252 = pnand %p250, %p251
      %p253 = pneg %p252
      // Predicated region
      $region33: #{tpu_custom_call.1} parent=5 // pred_check
        _
      $region34: #{tpu_custom_call.1} parent=5 // pred_check_branch
        %255 = sbr.rel (%p252) target = $region36
      $region35: #{tpu_custom_call.1} parent=5 // pred_region
        %s256 = ssub.s32 %s13, 1
        %s257 = sadd.s32 %s22, %s23
        %p258 = scmp.lt.s32.totalorder %s257, 0
        %s259 = scalar_select %p258, %s257, 0
        %p260 = scmp.lt.s32.totalorder %s259, 0
        %s261 = scalar_select %p260, %s259, 0
        %s262 = smul.addr %s261, 8
        %s263 = scalar_lea.vmem %s0, %s262
        %p264 = pneg %p57
        %p265 = pneg %p54
        %s266 = sadd.s32 %s22, %s23
        %p267 = scmp.lt.s32.totalorder %s266, 0
        %s268 = scalar_select %p267, %s266, 0
        %p269 = scmp.lt.s32.totalorder %s268, 0
        %s270 = scalar_select %p269, %s268, 0
        %s271 = smul.addr %s270, 2
        %s272 = scalar_lea.vmem %s1, %s271
        %p273 = pneg %p89
        %p274 = pneg %p86
        %s275 = sadd.s32 %s22, %s23
        %p276 = scmp.lt.s32.totalorder %s275, 0
        %s277 = scalar_select %p276, %s275, 0
        %p278 = scmp.lt.s32.totalorder %s277, 0
        %s279 = scalar_select %p278, %s277, 0
        %s280 = smul.addr %s279, 2
        %s281 = scalar_lea.vmem %s2, %s280
        %p282 = pneg %p121
        %p283 = pneg %p118
        %s284 = sadd.s32 %s22, %s23
        %p285 = scmp.lt.s32.totalorder %s284, 0
        %s286 = scalar_select %p285, %s284, 0
        %p287 = scmp.lt.s32.totalorder %s286, 0
        %s288 = scalar_select %p287, %s286, 0
        %s289 = smul.addr %s288, 8
        %s290 = scalar_lea.vmem %s3, %s289
        %p291 = pneg %p153
        %p292 = pneg %p150
        %p293 = pneg %p179
        %p294 = pneg %p176
        %s295 = sand.u32 %s166, 1
        %s296 = scalar_lea.sflag [#allocation4], %s295
        %s297 = sand.u32 %s166, 1
        %s298 = smul.addr %s297, 2
        %s299 = scalar_lea.vmem [#allocation3], %s298
        %s300 = sadd.s32 %s22, %s23
        %p301 = scmp.lt.s32.totalorder %s300, 0
        %s302 = scalar_select %p301, %s300, 0
        %p303 = scmp.lt.s32.totalorder %s302, 0
        %s304 = scalar_select %p303, %s302, 0
        %s305 = smul.addr %s304, 8
        %s306 = scalar_lea.vmem %s0, %s305
        %s307 = sadd.s32 %s22, %s23
        %p308 = scmp.lt.s32.totalorder %s307, 0
        %s309 = scalar_select %p308, %s307, 0
        %s310 = sadd.s32 %s22, %s23
        %p311 = scmp.lt.s32.totalorder %s310, 0
        %s312 = scalar_select %p311, %s310, 0
        %p313 = scmp.lt.s32.totalorder %s312, 0
        %s314 = scalar_select %p313, %s312, 0
        %s315 = smul.addr %s314, 2
        %s316 = scalar_lea.vmem %s1, %s315
        %s317 = sadd.s32 %s22, %s23
        %p318 = scmp.lt.s32.totalorder %s317, 0
        %s319 = scalar_select %p318, %s317, 0
        %s320 = sadd.s32 %s22, %s23
        %p321 = scmp.lt.s32.totalorder %s320, 0
        %s322 = scalar_select %p321, %s320, 0
        %p323 = scmp.lt.s32.totalorder %s322, 0
        %s324 = scalar_select %p323, %s322, 0
        %s325 = smul.addr %s324, 2
        %s326 = scalar_lea.vmem %s2, %s325
        %s327 = sadd.s32 %s22, %s23
        %p328 = scmp.lt.s32.totalorder %s327, 0
        %s329 = scalar_select %p328, %s327, 0
        %s330 = sadd.s32 %s22, %s23
        %p331 = scmp.lt.s32.totalorder %s330, 0
        %s332 = scalar_select %p331, %s330, 0
        %p333 = scmp.lt.s32.totalorder %s332, 0
        %s334 = scalar_select %p333, %s332, 0
        %s335 = smul.addr %s334, 8
        %s336 = scalar_lea.vmem %s3, %s335
        %s337 = sadd.s32 %s22, %s23
        %p338 = scmp.lt.s32.totalorder %s337, 0
        %s339 = scalar_select %p338, %s337, 0
        %p340 = scmp.eq.s32.totalorder %s23, 0
        // Predicated region
        $region37: #{tpu_custom_call.1} parent=35 // pred_check
          %p341 = pneg %p340
        $region38: #{tpu_custom_call.1} parent=35 // pred_check_branch
          %343 = sbr.rel (%p341) target = $region40
        $region39: #{tpu_custom_call.1} parent=35 // pred_region
          %vm344 = vcmask 123904
          %345 = vst.msk [vmem:[#allocation2] sm:$0x3] %vm344, 0.0
        $region40: #{tpu_custom_call.1} parent=35 // pred_fallthru
          _
        %s346 = sadd.s32 %s22, %s23
        %v347 = vlaneseq
        %v348 = vand.u32 %v347, 127
        %s349 = smul.u32 %s346, 16
        %v350 = vstv %s349
        %v351 = vadd.s32 %v350, %v348
        %vm352 = vcmp.lt.s32.totalorder %v351, 16
        %v353 = vld [vmem:[%s336] sm:$0xff]
        %v354 = vld [vmem:[%s336 + $0x8] sm:$0xff]
        %v355 = vld [vmem:[%s336 + $0x10] sm:$0xff]
        %v356 = vld [vmem:[%s336 + $0x18] sm:$0x3f]
        %vm357 = vcmp.eq.s32.totalorder %v353, 0
        %vm358 = vcmp.eq.s32.totalorder %v354, 0
        %vm359 = vcmp.eq.s32.totalorder %v355, 0
        %vm360 = vcmp.eq.s32.totalorder %v356, 0
        %v361 = vsel %vm352, 1, 0
        %vm362 = vcmp.eq.s32.totalorder %v361, 1
        %vm363 = vmand %vm357, %vm362
        %vm364 = vmand %vm358, %vm362
        %vm365 = vmand %vm359, %vm362
        %vm366 = vmand %vm360, %vm362
        %vm367 = vcmp.eq.s32.totalorder %v353, 1
        %vm368 = vcmp.eq.s32.totalorder %v354, 1
        %vm369 = vcmp.eq.s32.totalorder %v355, 1
        %vm370 = vcmp.eq.s32.totalorder %v356, 1
        %vm371 = vmand %vm367, %vm362
        %vm372 = vmand %vm368, %vm362
        %vm373 = vmand %vm369, %vm362
        %vm374 = vmand %vm370, %vm362
        %v375 = vsel %vm363, 1, 0
        %v376 = vsel %vm364, 1, 0
        %v377 = vsel %vm365, 1, 0
        %v378 = vsel %vm366, 1, 0
        %v379 = vcvt.s32.f32 %v375
        %v380 = vcvt.s32.f32 %v376
        %v381 = vcvt.s32.f32 %v377
        %v382 = vcvt.s32.f32 %v378
        %vm383 = vcmask 130048
        %v384 = vsel %vm383, %v379, 0.0
        %v385 = vsel %vm383, %v380, 0.0
        %v386 = vadd.f32 %v384, %v385
        %v387 = vsel %vm383, %v381, 0.0
        %v388 = vadd.f32 %v386, %v387
        %vm389 = vcmask 128000
        %v390 = vsel %vm389, %v382, 0.0
        %v391 = vadd.f32 %v388, %v390
        %v392 = vrot.slane %v391, 4
        %v393 = vadd.f32 %v391, %v392
        %v394 = vrot.slane %v393, 2
        %v395 = vadd.f32 %v393, %v394
        %v396 = vrot.slane %v395, 1
        %v397 = vadd.f32 %v395, %v396
        %v398 = vsel %vm371, 1, 0
        %v399 = vsel %vm372, 1, 0
        %v400 = vsel %vm373, 1, 0
        %v401 = vsel %vm374, 1, 0
        %v402 = vcvt.s32.f32 %v398
        %v403 = vcvt.s32.f32 %v399
        %v404 = vcvt.s32.f32 %v400
        %v405 = vcvt.s32.f32 %v401
        %v406 = vsel %vm383, %v402, 0.0
        %v407 = vsel %vm383, %v403, 0.0
        %v408 = vadd.f32 %v406, %v407
        %v409 = vsel %vm383, %v404, 0.0
        %v410 = vadd.f32 %v408, %v409
        %v411 = vsel %vm389, %v405, 0.0
        %v412 = vadd.f32 %v410, %v411
        %v413 = vrot.slane %v412, 4
        %v414 = vadd.f32 %v412, %v413
        %v415 = vrot.slane %v414, 2
        %v416 = vadd.f32 %v414, %v415
        %v417 = vrot.slane %v416, 1
        %v418 = vadd.f32 %v416, %v417
        %v419 = vadd.f32 %v397, %v418
        %v420 = vld [vmem:[%s306] sm:$0xff]
        %v421 = vld [vmem:[%s306 + $0x8] sm:$0xff]
        %v422 = vld [vmem:[%s306 + $0x10] sm:$0xff]
        %v423 = vld [vmem:[%s306 + $0x18] sm:$0x3f]
        %s424 = scalar_lea.vmem %s306, 32
        %v425 = vld [vmem:[%s424] sm:$0xff]
        %v426 = vld [vmem:[%s424 + $0x8] sm:$0xff]
        %v427 = vld [vmem:[%s424 + $0x10] sm:$0xff]
        %v428 = vld [vmem:[%s424 + $0x18] sm:$0x3f]
        %v429 = vsub.f32 %v425, %v420
        %v430 = vsub.f32 %v426, %v421
        %v431 = vsub.f32 %v427, %v422
        %v432 = vsub.f32 %v428, %v423
        %v433 = vmul.f32 %v429, 1.442695
        %v434 = vpow.pop %v433
        %v435 = vmul.f32 %v430, 1.442695
        %v436 = vpow.pop %v435
        %v437 = vmul.f32 %v431, 1.442695
        %v438 = vpow.pop %v437
        %v439 = vmul.f32 %v432, 1.442695
        %v440 = vpow.pop %v439
        %v441 = vadd.f32 %v434, 1.0
        %v442 = vadd.f32 %v436, 1.0
        %v443 = vadd.f32 %v438, 1.0
        %v444 = vadd.f32 %v440, 1.0
        %v445 = vrcp.pop %v441
        %v446 = vmul.f32 %v441, %v445
        %v447 = vsub.f32 1.0, %v446
        %v448 = vmul.f32 %v445, %v447
        %v449 = vadd.f32 %v445, %v448
        %vm450 = vweird.f32 %v441
        %vm451 = vweird.f32 %v445
        %vm452 = vmor %vm450, %vm451
        %v453 = vsel %vm452, %v445, %v449
        %v454 = vand.u32 2147483647, %v441
        %vm455 = vcmp.eq.f32.partialorder %v454, 8.507059e+37
        %v456 = vand.u32 %v441, 2147483648
        %v457 = vor.u32 1.1754944e-38, %v456
        %v458 = vsel %vm455, %v457, %v453
        %v459 = vmul.f32 1.0, %v458
        %v460 = vrcp.pop %v442
        %v461 = vmul.f32 %v442, %v460
        %v462 = vsub.f32 1.0, %v461
        %v463 = vmul.f32 %v460, %v462
        %v464 = vadd.f32 %v460, %v463
        %vm465 = vweird.f32 %v442
        %vm466 = vweird.f32 %v460
        %vm467 = vmor %vm465, %vm466
        %v468 = vsel %vm467, %v460, %v464
        %v469 = vand.u32 2147483647, %v442
        %vm470 = vcmp.eq.f32.partialorder %v469, 8.507059e+37
        %v471 = vand.u32 %v442, 2147483648
        %v472 = vor.u32 1.1754944e-38, %v471
        %v473 = vsel %vm470, %v472, %v468
        %v474 = vmul.f32 1.0, %v473
        %v475 = vrcp.pop %v443
        %v476 = vmul.f32 %v443, %v475
        %v477 = vsub.f32 1.0, %v476
        %v478 = vmul.f32 %v475, %v477
        %v479 = vadd.f32 %v475, %v478
        %vm480 = vweird.f32 %v443
        %vm481 = vweird.f32 %v475
        %vm482 = vmor %vm480, %vm481
        %v483 = vsel %vm482, %v475, %v479
        %v484 = vand.u32 2147483647, %v443
        %vm485 = vcmp.eq.f32.partialorder %v484, 8.507059e+37
        %v486 = vand.u32 %v443, 2147483648
        %v487 = vor.u32 1.1754944e-38, %v486
        %v488 = vsel %vm485, %v487, %v483
        %v489 = vmul.f32 1.0, %v488
        %v490 = vrcp.pop %v444
        %v491 = vmul.f32 %v444, %v490
        %v492 = vsub.f32 1.0, %v491
        %v493 = vmul.f32 %v490, %v492
        %v494 = vadd.f32 %v490, %v493
        %vm495 = vweird.f32 %v444
        %vm496 = vweird.f32 %v490
        %vm497 = vmor %vm495, %vm496
        %v498 = vsel %vm497, %v490, %v494
        %v499 = vand.u32 2147483647, %v444
        %vm500 = vcmp.eq.f32.partialorder %v499, 8.507059e+37
        %v501 = vand.u32 %v444, 2147483648
        %v502 = vor.u32 1.1754944e-38, %v501
        %v503 = vsel %vm500, %v502, %v498
        %v504 = vmul.f32 1.0, %v503
        %v505 = vsub.f32 1.0, %v459
        %v506 = vsub.f32 1.0, %v474
        %v507 = vsub.f32 1.0, %v489
        %v508 = vsub.f32 1.0, %v504
        %v509 = vsub.f32 0.6, %v459
        %v510 = vsub.f32 0.6, %v474
        %v511 = vsub.f32 0.6, %v489
        %v512 = vsub.f32 0.6, %v504
        %v513 = vmax.f32 %v509, 0.0
        %v514 = vmax.f32 %v510, 0.0
        %v515 = vmax.f32 %v511, 0.0
        %v516 = vmax.f32 %v512, 0.0
        %v517 = vsub.f32 %v505, 0.6
        %v518 = vsub.f32 %v506, 0.6
        %v519 = vsub.f32 %v507, 0.6
        %v520 = vsub.f32 %v508, 0.6
        %v521 = vmax.f32 %v517, 0.0
        %v522 = vmax.f32 %v518, 0.0
        %v523 = vmax.f32 %v519, 0.0
        %v524 = vmax.f32 %v520, 0.0
        %v525 = vadd.f32 %v513, %v521
        %v526 = vadd.f32 %v514, %v522
        %v527 = vadd.f32 %v515, %v523
        %v528 = vadd.f32 %v516, %v524
        %v529 = vsub.f32 %v459, 0.6
        %v530 = vsub.f32 %v474, 0.6
        %v531 = vsub.f32 %v489, 0.6
        %v532 = vsub.f32 %v504, 0.6
        %v533 = vmax.f32 %v529, 0.0
        %v534 = vmax.f32 %v530, 0.0
        %v535 = vmax.f32 %v531, 0.0
        %v536 = vmax.f32 %v532, 0.0
        %v537 = vsub.f32 0.6, %v505
        %v538 = vsub.f32 0.6, %v506
        %v539 = vsub.f32 0.6, %v507
        %v540 = vsub.f32 0.6, %v508
        %v541 = vmax.f32 %v537, 0.0
        %v542 = vmax.f32 %v538, 0.0
        %v543 = vmax.f32 %v539, 0.0
        %v544 = vmax.f32 %v540, 0.0
        %v545 = vadd.f32 %v533, %v541
        %v546 = vadd.f32 %v534, %v542
        %v547 = vadd.f32 %v535, %v543
        %v548 = vadd.f32 %v536, %v544
        %v549 = vsel %vm371, %v545, 0.0
        %v550 = vsel %vm372, %v546, 0.0
        %v551 = vsel %vm373, %v547, 0.0
        %v552 = vsel %vm374, %v548, 0.0
        %v553 = vsel %vm363, %v525, %v549
        %v554 = vsel %vm364, %v526, %v550
        %v555 = vsel %vm365, %v527, %v551
        %v556 = vsel %vm366, %v528, %v552
        %v557 = vsel %vm383, %v553, 0.0
        %v558 = vsel %vm383, %v554, 0.0
        %v559 = vadd.f32 %v557, %v558
        %v560 = vsel %vm383, %v555, 0.0
        %v561 = vadd.f32 %v559, %v560
        %v562 = vsel %vm389, %v556, 0.0
        %v563 = vadd.f32 %v561, %v562
        %v564 = vrot.slane %v563, 4
        %v565 = vadd.f32 %v563, %v564
        %v566 = vrot.slane %v565, 2
        %v567 = vadd.f32 %v565, %v566
        %v568 = vrot.slane %v567, 1
        %v569 = vadd.f32 %v567, %v568
        %v570 = vld [vmem:[%s316] sm:$0x3]
        %v572 = vrot.slane %v570, 7
        %v574 = vsub.f32 %v570, %v572
        %v575 = vmul.f32 %v574, 1.442695
        %v576 = vpow.pop %v575
        %v577 = vadd.f32 %v576, 1.0
        %v578 = vrcp.pop %v577
        %v579 = vmul.f32 %v577, %v578
        %v580 = vsub.f32 1.0, %v579
        %v581 = vmul.f32 %v578, %v580
        %v582 = vadd.f32 %v578, %v581
        %vm583 = vweird.f32 %v577
        %vm584 = vweird.f32 %v578
        %vm585 = vmor %vm583, %vm584
        %v586 = vsel %vm585, %v578, %v582
        %v587 = vand.u32 2147483647, %v577
        %vm588 = vcmp.eq.f32.partialorder %v587, 8.507059e+37
        %v589 = vand.u32 %v577, 2147483648
        %v590 = vor.u32 1.1754944e-38, %v589
        %v591 = vsel %vm588, %v590, %v586
        %v592 = vmul.f32 1.0, %v591
        %v593 = vsub.f32 1.0, %v592
        %v594 = vsub.f32 0.6, %v592
        %v595 = vmax.f32 %v594, 0.0
        %v596 = vsub.f32 %v593, 0.6
        %v597 = vmax.f32 %v596, 0.0
        %v598 = vadd.f32 %v595, %v597
        %v599 = vsub.f32 %v592, 0.6
        %v600 = vmax.f32 %v599, 0.0
        %v601 = vsub.f32 0.6, %v593
        %v602 = vmax.f32 %v601, 0.0
        %v603 = vadd.f32 %v600, %v602
        %vm604 = vcmp.gt.f32.partialorder %v419, 0.0
        %v605 = vmul.f32 %v598, %v397
        %v606 = vmul.f32 %v603, %v418
        %v607 = vadd.f32 %v605, %v606
        %v608 = vsel %vm604, %v607, 0.0
        %v609 = vld [vmem:[%s326] sm:$0x3]
        %v611 = vrot.slane %v609, 7
        %v613 = vsub.f32 %v609, %v611
        %v614 = vmul.f32 %v613, 1.442695
        %v615 = vpow.pop %v614
        %v616 = vadd.f32 %v615, 1.0
        %v617 = vrcp.pop %v616
        %v618 = vmul.f32 %v616, %v617
        %v619 = vsub.f32 1.0, %v618
        %v620 = vmul.f32 %v617, %v619
        %v621 = vadd.f32 %v617, %v620
        %vm622 = vweird.f32 %v616
        %vm623 = vweird.f32 %v617
        %vm624 = vmor %vm622, %vm623
        %v625 = vsel %vm624, %v617, %v621
        %v626 = vand.u32 2147483647, %v616
        %vm627 = vcmp.eq.f32.partialorder %v626, 8.507059e+37
        %v628 = vand.u32 %v616, 2147483648
        %v629 = vor.u32 1.1754944e-38, %v628
        %v630 = vsel %vm627, %v629, %v625
        %v631 = vmul.f32 1.0, %v630
        %v632 = vsub.f32 1.0, %v631
        %v633 = vsub.f32 0.6, %v631
        %v634 = vmax.f32 %v633, 0.0
        %v635 = vsub.f32 %v632, 0.6
        %v636 = vmax.f32 %v635, 0.0
        %v637 = vadd.f32 %v634, %v636
        %v638 = vsub.f32 %v631, 0.6
        %v639 = vmax.f32 %v638, 0.0
        %v640 = vsub.f32 0.6, %v632
        %v641 = vmax.f32 %v640, 0.0
        %v642 = vadd.f32 %v639, %v641
        %v643 = vmul.f32 %v637, %v397
        %v644 = vmul.f32 %v642, %v418
        %v645 = vadd.f32 %v643, %v644
        %v646 = vsel %vm604, %v645, 0.0
        %v647 = vld [vmem:[#allocation2] sm:$0x1]
        %v648 = vmul.f32 %v569, 0.6
        %v649 = vmul.f32 %v608, 0.2
        %v650 = vadd.f32 %v648, %v649
        %v651 = vmul.f32 %v646, 0.2
        %v652 = vadd.f32 %v650, %v651
        %v654 = vrot.slane %v652, 1
        %v656 = vadd.f32 %v647, %v654
        %vm657 = vcmask 122880
        %658 = vst.msk [vmem:[#allocation2] sm:$0x1] %vm657, %v656
        %v659 = vld [vmem:[#allocation2 + $0x1] sm:$0x1]
        %v660 = vadd.f32 %v659, %v419
        %661 = vst.msk [vmem:[#allocation2 + $0x1] sm:$0x1] %vm657, %v660
        // Predicated region
        $region41: #{tpu_custom_call.1} parent=35 // pred_check
          %p662 = pneg %p340
        $region42: #{tpu_custom_call.1} parent=35 // pred_check_branch
          %664 = sbr.rel (%p662) target = $region44
        $region43: #{tpu_custom_call.1} parent=35 // pred_region
          %v665 = vld [vmem:[#allocation2] sm:$0x3]
          %vm666 = vcmask 123904
          %667 = vst.msk [vmem:[%s299] sm:$0x3] %vm666, %v665
        $region44: #{tpu_custom_call.1} parent=35 // pred_fallthru
          _
        %s668 = sand.u32 %s166, 1
        %s669 = scalar_lea.sflag [#allocation4], %s668
        %s670 = sand.u32 %s166, 1
        %s671 = smul.addr %s670, 2
        %s672 = scalar_lea.vmem [#allocation3], %s671
        // Predicated region
        $region45: #{tpu_custom_call.1} parent=35 // pred_check
          %p673 = pneg %p176
        $region46: #{tpu_custom_call.1} parent=35 // pred_check_branch
          %675 = sbr.rel (%p673) target = $region48
        $region47: #{tpu_custom_call.1} parent=35 // pred_region
          %677 = vsyncadd %s669, 0
          %s678 = smul.addr %s22, 2
          %s679 = scalar_lea.hbm %s4, %s678
          %s681 = sshll.u32 %s672, 4
          %s682 = int_to_ptr.vmem [resolvable:$true] %s681
          %s683 = sshll.u32 %s679, 4
          %s684 = int_to_ptr.hbm [resolvable:$true] %s683
          %686 = dma.vmem_to_hbm [thread:$0]  %s682, 32, %s684, %s669
        $region48: #{tpu_custom_call.1} parent=35 // pred_fallthru
          _
      $region36: #{tpu_custom_call.1} parent=5 // pred_fallthru
        _
      %p687 = scmp.le.s32.totalorder 2, %s13
      // Predicated region
      $region49: #{tpu_custom_call.1} parent=5 // pred_check
        %p688 = pneg %p687
      $region50: #{tpu_custom_call.1} parent=5 // pred_check_branch
        %690 = sbr.rel (%p688) target = $region52
      $region51: #{tpu_custom_call.1} parent=5 // pred_region
        %s691 = ssub.s32 %s13, 2
        // Predicated region
        $region53: #{tpu_custom_call.1} parent=51 // pred_check
          %p692 = pneg %p182
        $region54: #{tpu_custom_call.1} parent=51 // pred_check_branch
          %694 = sbr.rel (%p692) target = $region56
        $region55: #{tpu_custom_call.1} parent=51 // pred_region
          %s695 = sand.u32 %s167, 1
          %s696 = scalar_lea.sflag [#allocation4], %s695
          %s697 = sand.u32 %s167, 1
          %s698 = smul.addr %s697, 2
          %s699 = scalar_lea.vmem [#allocation3], %s698
          %701 = dma.done %s696, 32
        $region56: #{tpu_custom_call.1} parent=51 // pred_fallthru
          _
      $region52: #{tpu_custom_call.1} parent=5 // pred_fallthru
        _
    $region6: #{tpu_custom_call.1} parent=1 // loop_footer
      %s17 = sadd.s32 1, %s13
    $region7: #{tpu_custom_call.1} parent=1 // loop_footer_branch
      %12 = sbr.rel target = $region3
    $region8: #{tpu_custom_call.1} parent=1 // loop_exit
      _
    %702 = vsyncpa [#allocation4], 1
    %s703 = scalar_lea.sflag [#allocation4], 1
    %704 = vsyncpa %s703, 1

</llo_original>
